<compile_context>
chip_gen: v7x
topology: tpu7x:2x2x1
jax: 0.10.0
libtpu: 0.0.40
codegen_flags: <defaults>
</compile_context>

<pallas_src>
import jax
import jax.numpy as jnp
from jax.experimental import pallas as pl
from jax.experimental.pallas import tpu as pltpu

_MIB = 1024 * 1024


def _pick_tile(dim: int, target: int, granule: int = 8) -> int:
    """Largest granule-aligned tile <= target that divides `dim`, else the full dim."""
    if dim <= target:
        return dim
    t = (target // granule) * granule
    while t >= granule:
        if dim % t == 0:
            return t
        t -= granule
    return dim  # no aligned divisor -> single full block (still correct)


def _vmem_capacity_bytes() -> int:
    """Per-core VMEM capacity; conservative 64 MiB (v7x) fallback if unqueryable."""
    try:
        cap = int(pltpu.get_tpu_info().vmem_capacity_bytes)
        if cap > 0:
            return cap
    except Exception:
        pass
    return 64 * _MIB


def _freq_expert_kernel(x_ref, w_ref, o_ref, acc_ref):
    # x_ref:   (TB, TN, D)   streamed token tile
    # w_ref:   (D, TDOUT)    merged weight tile  ((W^T + s*A@B)/N, (in, out) layout)
    # o_ref:   (TB, TDOUT)   output tile, resident across the token (reduction) axis
    # acc_ref: (TB, D)       f32 token-sum accumulator (VMEM scratch)
    k = pl.program_id(2)

    @pl.when(k == 0)
    def _init():
        acc_ref[...] = jnp.zeros_like(acc_ref)

    # Partial token-sum over this tile; accumulate in f32 regardless of input dtype.
    acc_ref[...] += jnp.sum(x_ref[...].astype(jnp.float32), axis=1)

    @pl.when(k == pl.num_programs(2) - 1)
    def _finalize():
        # 1/N is folded into the merged weight, so (token sum) @ W_eff == pooled @ W_eff.
        o_ref[...] = jnp.dot(acc_ref[...], w_ref[...],
                             preferred_element_type=jnp.float32).astype(o_ref.dtype)


def _merge_weight(w, a, b, *, lora_alpha, r, n_tokens, weight_dtype=jnp.float32):
    """W_eff = (W^T + (alpha/r) * A @ B) / N, stored (in_features, out_features)."""
    scaling = jnp.float32(lora_alpha / r)
    w_eff = (w.astype(jnp.float32).T
             + scaling * jnp.dot(a.astype(jnp.float32), b.astype(jnp.float32)))
    return (w_eff * jnp.float32(1.0 / n_tokens)).astype(weight_dtype)


def _freq_expert_pallas(vit_tokens, w_eff, *, tb_target=64, tn_target=256, td_out=None):
    B, N, D = vit_tokens.shape
    assert w_eff.shape == (D, D)

    x_itemsize = jnp.dtype(vit_tokens.dtype).itemsize
    w_itemsize = jnp.dtype(w_eff.dtype).itemsize

    vmem_cap = _vmem_capacity_bytes()
    usable = max(vmem_cap - 16 * _MIB, 24 * _MIB)   # leave headroom for compiler scratch

    # ---- output-dim tile: keep full (D, D) weight resident unless too big ----
    if td_out is None:
        w_budget = min(24 * _MIB, usable // 3)
        td_target = max(128, w_budget // max(1, D * w_itemsize))
        td_out = _pick_tile(D, td_target, granule=128)
    else:
        assert D % td_out == 0, "td_out must divide D"
    w_tile_bytes = D * td_out * w_itemsize          # single-buffered (pl.Buffered(1))

    # ---- batch tile: >=2 tiles when possible so the 'parallel' axis shards across
    #      both v7x TensorCores (no effect on single-TC v5e/v6e) ----
    if B // 2 >= 8:
        tb_target = min(tb_target, B // 2)
    TB = _pick_tile(B, tb_target, granule=8)

    # ---- token tile: dtype-aware sublane granule + VMEM-aware cap ----
    tn_granule = 8 * max(1, 4 // x_itemsize)        # 8 f32, 16 bf16, 32 int8/fp8
    fixed_bytes = w_tile_bytes + 2 * TB * td_out * 4 + TB * D * 4
    min_x_bytes = 2 * TB * tn_granule * D * x_itemsize
    x_budget = max(usable - fixed_bytes, min_x_bytes)
    tn_cap = max(tn_granule, x_budget // (2 * TB * D * x_itemsize))
    TN = _pick_tile(N, min(tn_target, int(tn_cap)), granule=tn_granule)

    grid = (B // TB, D // td_out, N // TN)

    vmem_bytes = (2 * TB * TN * D * x_itemsize      # double-buffered token stream
                  + w_tile_bytes                    # single-buffered weight tile
                  + 2 * TB * td_out * 4             # output block
                  + TB * D * 4)                     # accumulator scratch
    vmem_limit = int(min(usable, max(16 * _MIB, int(vmem_bytes * 1.3) + 2 * _MIB)))

    cost = pl.CostEstimate(
        flops=2 * B * D * D + B * N * D,
        transcendentals=0,
        bytes_accessed=(B * N * D * x_itemsize * (D // td_out)
                        + (B // TB) * D * D * w_itemsize
                        + B * D * 4),
    )

    x_spec = pl.BlockSpec((TB, TN, D), lambda i, j, k: (i, k, 0))
    try:
        # Constant-index (per token loop) weight needs only one VMEM buffer; the second
        # pipeline buffer would be pure waste -- biggest relative win on v7x.
        w_spec = pl.BlockSpec((D, td_out), lambda i, j, k: (0, j),
                              pipeline_mode=pl.Buffered(1))
    except TypeError:  # older jax without pipeline_mode kwarg
        w_spec = pl.BlockSpec((D, td_out), lambda i, j, k: (0, j))
    o_spec = pl.BlockSpec((TB, td_out), lambda i, j, k: (i, j))

    return pl.pallas_call(
        _freq_expert_kernel,
        out_shape=jax.ShapeDtypeStruct((B, D), jnp.float32),
        grid_spec=pltpu.PrefetchScalarGridSpec(
            num_scalar_prefetch=0,
            grid=grid,
            in_specs=[x_spec, w_spec],
            out_specs=o_spec,
            scratch_shapes=[pltpu.VMEM((TB, D), jnp.float32)],
        ),
        compiler_params=pltpu.CompilerParams(
            dimension_semantics=("parallel", "parallel", "arbitrary"),
            vmem_limit_bytes=vmem_limit,
        ),
        cost_estimate=cost,
    )(vit_tokens, w_eff)


def frequency_expert_forward(vit_tokens, w, a, b, *, lora_alpha: int = 8, r: int = 4,
                             tb_target: int = 64, tn_target: int = 256, td_out=None,
                             weight_dtype=jnp.float32):
    """One-shot FrequencyExpert forward: merges the weight then runs the kernel.

    vit_tokens: (B, N, D)   w: (D, D) PyTorch (out, in)   a: (D, r)   b: (r, D)
    returns:    (B, D) float32
    """
    _, N, _ = vit_tokens.shape
    w_eff = _merge_weight(w, a, b, lora_alpha=lora_alpha, r=r, n_tokens=N,
                          weight_dtype=weight_dtype)
    return _freq_expert_pallas(vit_tokens, w_eff, tb_target=tb_target,
                               tn_target=tn_target, td_out=td_out)


def make_frequency_expert(w, a, b, *, n_tokens: int, lora_alpha: int = 8, r: int = 4,
                          tb_target: int = 64, tn_target: int = 256, td_out=None,
                          weight_dtype=jnp.float32):
    """Precompute/cache the merged weight once (params are frozen at inference) and
    return a jitted forward over vit_tokens -- avoids re-merging W_eff every call."""
    w_eff = jax.block_until_ready(
        _merge_weight(w, a, b, lora_alpha=lora_alpha, r=r, n_tokens=n_tokens,
                      weight_dtype=weight_dtype))

    @jax.jit
    def forward(vit_tokens):
        return _freq_expert_pallas(vit_tokens, w_eff, tb_target=tb_target,
                                   tn_target=tn_target, td_out=td_out)

    return forward


def _reference_forward(vit_tokens, w, a, b, *, lora_alpha: int = 8, r: int = 4):
    pooled = jnp.mean(vit_tokens.astype(jnp.float32), axis=1)
    return pooled @ w.T + (lora_alpha / r) * (pooled @ a @ b)


if __name__ == "__main__":
    # TODO(synk): nn.Dropout on the LoRA branch is identity at dropout=0.0 (inference);
    # training-time dropout is not implemented in-kernel.
    LORA_ALPHA, R = 8, 4
    key = jax.random.PRNGKey(0)
    ks = jax.random.split(key, 10)

    # --- primary test: small module-consistent shapes (batch=2, seq=8, embed=32) ---
    B, N, D = 2, 8, 32
    x = jax.random.normal(ks[0], (B, N, D), dtype=jnp.float32)
    w = jnp.zeros((D, D), dtype=jnp.float32)                       # module zero-inits base W
    a = 0.02 * jax.random.normal(ks[1], (D, R), dtype=jnp.float32)
    b = 0.02 * jax.random.normal(ks[2], (R, D), dtype=jnp.float32)

    out = jax.block_until_ready(
        frequency_expert_forward(x, w, a, b, lora_alpha=LORA_ALPHA, r=R))
    ref = _reference_forward(x, w, a, b, lora_alpha=LORA_ALPHA, r=R)
    assert out.shape == (B, D)
    assert jnp.allclose(out, ref, atol=1e-5, rtol=1e-5), "mismatch vs reference (small)"

    # --- multi-step token grid via cached-weight path (pl.when init/finalize over the
    #     'arbitrary' reduction axis; grid = (1, 1, 4)) ---
    B2, N2, D2 = 8, 32, 128
    x2 = jax.random.normal(ks[3], (B2, N2, D2), dtype=jnp.float32)
    w2 = jax.random.normal(ks[4], (D2, D2), dtype=jnp.float32)     # general nonzero base W
    a2 = 0.02 * jax.random.normal(ks[5], (D2, R), dtype=jnp.float32)
    b2 = 0.02 * jax.random.normal(ks[6], (R, D2), dtype=jnp.float32)

    fwd2 = make_frequency_expert(w2, a2, b2, n_tokens=N2, lora_alpha=LORA_ALPHA, r=R,
                                 tn_target=8)
    out2 = jax.block_until_ready(fwd2(x2))
    ref2 = _reference_forward(x2, w2, a2, b2, lora_alpha=LORA_ALPHA, r=R)
    assert jnp.allclose(out2, ref2, atol=1e-5, rtol=1e-4), "mismatch vs reference (tiled)"

    # --- output-dim tiled path (3-D grid with weight tiles, as used for large D);
    #     grid = (2 batch, 2 out-D, 2 token) ---
    B3, N3, D3 = 16, 16, 256
    x3 = jax.random.normal(ks[7], (B3, N3, D3), dtype=jnp.float32)
    w3 = jax.random.normal(ks[8], (D3, D3), dtype=jnp.float32)
    a3 = 0.02 * jax.random.normal(ks[9], (D3, R), dtype=jnp.float32)
    b3 = 0.02 * jax.random.normal(ks[0], (R, D3), dtype=jnp.float32)

    out3 = jax.block_until_ready(frequency_expert_forward(
        x3, w3, a3, b3, lora_alpha=LORA_ALPHA, r=R,
        tb_target=8, tn_target=8, td_out=128))
    ref3 = _reference_forward(x3, w3, a3, b3, lora_alpha=LORA_ALPHA, r=R)
    assert jnp.allclose(out3, ref3, atol=1e-4, rtol=1e-3), "mismatch vs reference (D-tiled)"

    print("KERNEL_OK")
</pallas_src>

<mosaic_0001>
module attributes {stable_mosaic.version = 11 : i64} {
  func.func @_freq_expert_kernel(%arg0: i32, %arg1: i32, %arg2: i32, %arg3: memref<2x8x32xf32, #tpu.memory_space<vmem>>, %arg4: memref<32x32xf32, #tpu.memory_space<vmem>>, %arg5: memref<2x32xf32, #tpu.memory_space<vmem>>, %arg6: memref<2x32xf32, #tpu.memory_space<vmem>>) attributes {dimension_semantics = [#tpu.dimension_semantics<parallel>, #tpu.dimension_semantics<parallel>, #tpu.dimension_semantics<arbitrary>], iteration_bounds = array<i64: 1, 1, 1>, scalar_prefetch = 0 : i64, scratch_operands = 1 : i64, tpu.core_type = #tpu.core_type<tc>, window_params = [{transform_indices = @transform_0, window_bounds = array<i64: 2, 8, 32>}, {pipeline_mode = #tpu.pipeline_mode<synchronous>, transform_indices = @transform_1, window_bounds = array<i64: 32, 32>}, {transform_indices = @transform_2, window_bounds = array<i64: 2, 32>}]} {
    %c0_i32 = arith.constant 0 : i32
    %0 = arith.cmpi eq, %arg2, %c0_i32 : i32
    %1 = arith.extui %0 : i1 to i32
    %c0_i32_0 = arith.constant 0 : i32
    %2 = arith.cmpi ne, %1, %c0_i32_0 : i32
    scf.if %2 {
      %cst_9 = arith.constant 0.000000e+00 : f32
      %11 = vector.broadcast %cst_9 : f32 to vector<2x32xf32>
      %c0_10 = arith.constant 0 : index
      %c0_11 = arith.constant 0 : index
      %12 = vector.load %arg6[%c0_10, %c0_11] : memref<2x32xf32, #tpu.memory_space<vmem>>, vector<2x32xf32>
      tpu.vector_store %arg6[%c0_10, %c0_11], %11 {strides = array<i32>} : memref<2x32xf32, #tpu.memory_space<vmem>>, vector<2x32xf32>,
    } else {
    }
    %c0 = arith.constant 0 : index
    %c0_1 = arith.constant 0 : index
    %3 = vector.load %arg6[%c0, %c0_1] : memref<2x32xf32, #tpu.memory_space<vmem>>, vector<2x32xf32>
    %c0_2 = arith.constant 0 : index
    %c0_3 = arith.constant 0 : index
    %c0_4 = arith.constant 0 : index
    %4 = vector.load %arg3[%c0_2, %c0_3, %c0_4] : memref<2x8x32xf32, #tpu.memory_space<vmem>>, vector<2x8x32xf32>
    %cst = arith.constant dense<0.000000e+00> : vector<2x32xf32>
    %5 = vector.multi_reduction <add>, %4, %cst [1] : vector<2x8x32xf32> to vector<2x32xf32>
    %6 = arith.addf %3, %5 : vector<2x32xf32>
    %c0_5 = arith.constant 0 : index
    %c0_6 = arith.constant 0 : index
    %7 = vector.load %arg6[%c0_5, %c0_6] : memref<2x32xf32, #tpu.memory_space<vmem>>, vector<2x32xf32>
    tpu.vector_store %arg6[%c0_5, %c0_6], %6 {strides = array<i32>} : memref<2x32xf32, #tpu.memory_space<vmem>>, vector<2x32xf32>,
    %c0_i32_7 = arith.constant 0 : i32
    %8 = arith.cmpi eq, %arg2, %c0_i32_7 : i32
    %9 = arith.extui %8 : i1 to i32
    %c0_i32_8 = arith.constant 0 : i32
    %10 = arith.cmpi ne, %9, %c0_i32_8 : i32
    scf.if %10 {
      %c0_9 = arith.constant 0 : index
      %c0_10 = arith.constant 0 : index
      %11 = vector.load %arg6[%c0_9, %c0_10] : memref<2x32xf32, #tpu.memory_space<vmem>>, vector<2x32xf32>
      %c0_11 = arith.constant 0 : index
      %c0_12 = arith.constant 0 : index
      %12 = vector.load %arg4[%c0_11, %c0_12] : memref<32x32xf32, #tpu.memory_space<vmem>>, vector<32x32xf32>
      %cst_13 = arith.constant dense<0.000000e+00> : vector<2x32xf32>
      %13 = tpu.matmul %11, %12, %cst_13 {dimension_numbers = #tpu.dot_dimension_numbers<[1], [0], [0], [1], [0, 0, 1, 1], [], []>} : vector<2x32xf32>, vector<32x32xf32>, vector<2x32xf32> -> vector<2x32xf32>
      %c0_14 = arith.constant 0 : index
      %c0_15 = arith.constant 0 : index
      %14 = vector.load %arg5[%c0_14, %c0_15] : memref<2x32xf32, #tpu.memory_space<vmem>>, vector<2x32xf32>
      tpu.vector_store %arg5[%c0_14, %c0_15], %13 {strides = array<i32>} : memref<2x32xf32, #tpu.memory_space<vmem>>, vector<2x32xf32>,
    } else {
    }
    return
  }
  func.func @transform_0(%arg0: i32, %arg1: i32, %arg2: i32) -> (i32, i32, i32) {
    %c0_i32 = arith.constant 0 : i32
    %c0_i32_0 = arith.constant 0 : i32
    return %arg0, %arg2, %c0_i32 : i32, i32, i32
  }
  func.func @transform_1(%arg0: i32, %arg1: i32, %arg2: i32) -> (i32, i32) {
    %c0_i32 = arith.constant 0 : i32
    %c0_i32_0 = arith.constant 0 : i32
    return %c0_i32, %arg1 : i32, i32
  }
  func.func @transform_2(%arg0: i32, %arg1: i32, %arg2: i32) -> (i32, i32) {
    %c0_i32 = arith.constant 0 : i32
    return %arg0, %arg1 : i32, i32
  }
}

</mosaic_0001>

<llo_original>
// kernel: tpu_custom_call.1
$region0: #{tpu_custom_call.1}
  #allocation0 [shape = 'u32[]', space=smem, size = 0x4, offset = 0x4, fixed_abs, tag = 'smem constant byte address 0x4 - core index']
  #allocation1 [shape = 'u32[144,128]{1,0:T(1,128)}', space=vmem, size = 0x12000, scoped, tag = 'internal scratch']
  #allocation2 [shape = 'f32[2,32]{1,0:T(2,128)}', space=vmem, size = 0x400, scoped, tag = 'scratch operand']
  %s0 = inlined_call_operand.hbm [shape: f32[2,8,32], index: 0, kind: input, shape index: {}]
  %s1 = inlined_call_operand.hbm [shape: f32[32,32], index: 1, kind: input, shape index: {}]
  %s2 = inlined_call_operand.hbm [shape: f32[2,32], index: 2, kind: output, shape index: {}]
  %s3 = sld [smem:[#allocation0]]
  $region34: #{tpu_custom_call.1} parent=0
    _
  %s5 = ssub.s32 1, %s3
  %s6 = scalar_select 0, %s5, %s3
  $region1: #{tpu_custom_call.1} parent=0
    #allocation3 [shape = 'u8[8192]{0}', space=vmem, size = 0x2000, scoped, tag = 'input window, operand 0, single buffered']
    #allocation4 [shape = 's32[1]{0}', space=sflag, size = 0x4, scoped, tag = 'scoped memory for tpu_custom_call.1']
    #allocation5 [shape = 's32[1]{0}', space=sflag, size = 0x4, scoped, tag = 'scoped memory for tpu_custom_call.1']
    #allocation6 [shape = 'u8[16384]{0}', space=vmem, size = 0x4000, scoped, tag = 'input window, operand 1, single buffered']
    #allocation7 [shape = 's32[1]{0}', space=sflag, size = 0x4, scoped, tag = 'scoped memory for tpu_custom_call.1']
    #allocation8 [shape = 'u8[1024]{0}', space=vmem, size = 0x400, scoped, tag = 'output window, operand 0, single buffered']
    %7 = vsyncpa [#allocation4], 0
    %8 = vsyncpa [#allocation7], 0
    %9 = vsyncpa [#allocation5], 0
    // Predicated region
    $region2: #{tpu_custom_call.1} parent=1 // pred_check
      _
    $region3: #{tpu_custom_call.1} parent=1 // pred_check_branch
      %11 = sbr.rel (0) target = $region5
    $region4: #{tpu_custom_call.1} parent=1 // pred_region
      %s13 = ssub.s32 256, 256
      %14 = vsyncadd [#allocation4], %s13
      %s15 = sshll.u32 [#allocation3], 4
      %s16 = int_to_ptr.vmem [resolvable:$true] %s15
      %21 = dma.hbm_to_vmem [thread:$0]  %s0, 256, %s16, [#allocation4], 128, 128, 8
    $region5: #{tpu_custom_call.1} parent=1 // pred_fallthru
      _
    // Predicated region
    $region6: #{tpu_custom_call.1} parent=1 // pred_check
      _
    $region7: #{tpu_custom_call.1} parent=1 // pred_check_branch
      %23 = sbr.rel (0) target = $region9
    $region8: #{tpu_custom_call.1} parent=1 // pred_region
      %s25 = ssub.s32 512, 512
      %26 = vsyncadd [#allocation7], %s25
      %s27 = sshll.u32 [#allocation6], 4
      %s28 = int_to_ptr.vmem [resolvable:$true] %s27
      %33 = dma.hbm_to_vmem [thread:$0]  %s1, 512, %s28, [#allocation7], 128, 128, 8
    $region9: #{tpu_custom_call.1} parent=1 // pred_fallthru
      _
    // Predicated region
    $region10: #{tpu_custom_call.1} parent=1 // pred_check
      _
    $region11: #{tpu_custom_call.1} parent=1 // pred_check_branch
      %35 = sbr.rel (0) target = $region13
    $region12: #{tpu_custom_call.1} parent=1 // pred_region
      %36 = dma.done [#allocation4], 256
    $region13: #{tpu_custom_call.1} parent=1 // pred_fallthru
      _
    // Predicated region
    $region14: #{tpu_custom_call.1} parent=1 // pred_check
      _
    $region15: #{tpu_custom_call.1} parent=1 // pred_check_branch
      %38 = sbr.rel (0) target = $region17
    $region16: #{tpu_custom_call.1} parent=1 // pred_region
      %39 = dma.done [#allocation7], 512
    $region17: #{tpu_custom_call.1} parent=1 // pred_fallthru
      _
    %p40 = scmp.eq.s32.totalorder 0, 0
    // Predicated region
    $region18: #{tpu_custom_call.1} parent=1 // pred_check
      %p41 = pneg %p40
    $region19: #{tpu_custom_call.1} parent=1 // pred_check_branch
      %43 = sbr.rel (%p41) target = $region21
    $region20: #{tpu_custom_call.1} parent=1 // pred_region
      %vm44 = vcmask 254976
      %45 = vst.msk [vmem:[#allocation2] sm:$0x3] %vm44, 0.0
    $region21: #{tpu_custom_call.1} parent=1 // pred_fallthru
      _
    %v46 = vld [vmem:[#allocation2] sm:$0x3]
    %v47 = vld [vmem:[#allocation3] sm:$0xff]
    %v48 = vld [vmem:[#allocation3 + $0x8] sm:$0xff]
    %vm49 = vcmask 261120
    %v50 = vsel %vm49, %v47, 0.0
    %v51 = vrot.slane %v50, 4
    %v52 = vadd.f32 %v50, %v51
    %v53 = vrot.slane %v52, 2
    %v54 = vadd.f32 %v52, %v53
    %v55 = vrot.slane %v54, 1
    %v56 = vadd.f32 %v54, %v55
    %v57 = vsel %vm49, %v48, 0.0
    %v58 = vrot.slane %v57, 4
    %v59 = vadd.f32 %v57, %v58
    %v60 = vrot.slane %v59, 2
    %v61 = vadd.f32 %v59, %v60
    %v62 = vrot.slane %v61, 1
    %v63 = vadd.f32 %v61, %v62
    %vm66 = vcmask 1041409
    %v67 = vsel %vm66, %v63, %v56
    %v69 = vadd.f32 %v46, %v67
    %vm70 = vcmask 254976
    %71 = vst.msk [vmem:[#allocation2] sm:$0x3] %vm70, %v69
    // Predicated region
    $region22: #{tpu_custom_call.1} parent=1 // pred_check
      %p72 = pneg %p40
    $region23: #{tpu_custom_call.1} parent=1 // pred_check_branch
      %74 = sbr.rel (%p72) target = $region25
    $region24: #{tpu_custom_call.1} parent=1 // pred_region
      %v75 = vld [vmem:[#allocation2] sm:$0x3]
      %v76 = vld [vmem:[#allocation6] sm:$0xff]
      %v77 = vld [vmem:[#allocation6 + $0x8] sm:$0xff]
      %v78 = vld [vmem:[#allocation6 + $0x10] sm:$0xff]
      %v79 = vld [vmem:[#allocation6 + $0x18] sm:$0xff]
      %v81 = vsel %vm49, %v75, 0
      %83 = vmatprep.subr.mxu0 0.0
      %84 = vmatpush1.msra.mxu0 %v76
      %85 = vmatprep.subr.mxu0 0.0
      %86 = vmatpush1.msra.mxu0 %v77
      %87 = vmatprep.subr.mxu0 0.0
      %88 = vmatpush1.msra.mxu0 %v78
      %89 = vmatprep.subr.mxu0 0.0
      %90 = vmatpush1.msra.mxu0 %v79
      %91 = vmatprep.subr.mxu0 0.0
      %92 = vmatpush1.msra.mxu0 0.0
      %93 = vmatprep.subr.mxu0 0.0
      %94 = vmatpush1.msra.mxu0 0.0
      %95 = vmatprep.subr.mxu0 0.0
      %96 = vmatpush1.msra.mxu0 0.0
      %97 = vmatprep.subr.mxu0 0.0
      %98 = vmatpush1.msra.mxu0 0.0
      %99 = vmatprep.subr.mxu0 0.0
      %100 = vmatpush1.msra.mxu0 0.0
      %101 = vmatprep.subr.mxu0 0.0
      %102 = vmatpush1.msra.mxu0 0.0
      %103 = vmatprep.subr.mxu0 0.0
      %104 = vmatpush1.msra.mxu0 0.0
      %105 = vmatprep.subr.mxu0 0.0
      %106 = vmatpush1.msra.mxu0 0.0
      %107 = vmatprep.subr.mxu0 0.0
      %108 = vmatpush1.msra.mxu0 0.0
      %109 = vmatprep.subr.mxu0 0.0
      %110 = vmatpush1.msra.mxu0 0.0
      %111 = vmatprep.subr.mxu0 0.0
      %112 = vmatpush1.msra.mxu0 0.0
      %113 = vmatprep.subr.mxu0 0.0
      %114 = vmatpush1.msra.mxu0 0.0
      %115 = vmatprep.subr.mxu0 0.0
      %116 = vmatpush1.msra.mxu0 0.0
      %117 = vmatprep.subr.mxu0 0.0
      %118 = vmatpush1.msra.mxu0 0.0
      %119 = vmatprep.subr.mxu0 0.0
      %120 = vmatpush1.msra.mxu0 0.0
      %121 = vmatprep.subr.mxu0 0.0
      %122 = vmatpush1.msra.mxu0 0.0
      %123 = vmatprep.subr.mxu0 0.0
      %124 = vmatpush1.msra.mxu0 0.0
      %125 = vmatprep.subr.mxu0 0.0
      %126 = vmatpush1.msra.mxu0 0.0
      %127 = vmatprep.subr.mxu0 0.0
      %128 = vmatpush1.msra.mxu0 0.0
      %129 = vmatprep.subr.mxu0 0.0
      %130 = vmatpush1.msra.mxu0 0.0
      %131 = vmatprep.subr.mxu0 0.0
      %132 = vmatpush1.msra.mxu0 0.0
      %133 = vmatprep.subr.mxu0 0.0
      %134 = vmatpush1.msra.mxu0 0.0
      %135 = vmatprep.subr.mxu0 0.0
      %136 = vmatpush1.msra.mxu0 0.0
      %137 = vmatprep.subr.mxu0 0.0
      %138 = vmatpush1.msra.mxu0 0.0
      %139 = vmatprep.subr.mxu0 0.0
      %140 = vmatpush1.msra.mxu0 0.0
      %141 = vmatprep.subr.mxu0 0.0
      %142 = vmatpush1.msra.mxu0 0.0
      %143 = vmatprep.subr.mxu0 0.0
      %144 = vmatpush1.msra.mxu0 0.0
      %145 = vmatprep.subr.mxu0 0.0
      %146 = vmatpush1.msra.mxu0 0.0
      %147 = vmatprep.mubr.f32.mxu0 0.0
      %148 = vmatmul.mubr.f32.gmra.mrb[0].mxu0 %v81
      %v149 = vpop.f32.mrb[0].mxu0
      %v150 = vadd.f32 0.0, %v149
      %v151 = vpop.f32.mrb[0].mxu0
      %152 = vdwg.mxu0
      %153 = vst.msk [vmem:[#allocation8] sm:$0x3] %vm70, %v150
    $region25: #{tpu_custom_call.1} parent=1 // pred_fallthru
      _
    // Predicated region
    $region26: #{tpu_custom_call.1} parent=1 // pred_check
      _
    $region27: #{tpu_custom_call.1} parent=1 // pred_check_branch
      %155 = sbr.rel (0) target = $region29
    $region28: #{tpu_custom_call.1} parent=1 // pred_region
      %s157 = ssub.s32 32, 32
      %158 = vsyncadd [#allocation5], %s157
      %s160 = sshll.u32 [#allocation8], 4
      %s161 = int_to_ptr.vmem [resolvable:$true] %s160
      %163 = dma.vmem_to_hbm [thread:$0]  %s161, 32, %s2, [#allocation5]
    $region29: #{tpu_custom_call.1} parent=1 // pred_fallthru
      _
    // Predicated region
    $region30: #{tpu_custom_call.1} parent=1 // pred_check
      _
    $region31: #{tpu_custom_call.1} parent=1 // pred_check_branch
      %165 = sbr.rel (0) target = $region33
    $region32: #{tpu_custom_call.1} parent=1 // pred_region
      %166 = dma.done [#allocation5], 32
    $region33: #{tpu_custom_call.1} parent=1 // pred_fallthru
      _
    %167 = vsyncpa [#allocation4], 1
    %168 = vsyncpa [#allocation7], 1
    %169 = vsyncpa [#allocation5], 1

</llo_original>
